<compile_context>
chip_gen: v6e
topology: v6e:2x2x1
jax: 0.10.0
libtpu: 0.0.40
codegen_flags: <defaults>
</compile_context>

<pallas_src>
import functools

import jax
import jax.numpy as jnp
from jax.experimental import pallas as pl
from jax.experimental.pallas import tpu as pltpu


def _round_up(x: int, m: int) -> int:
    return (x + m - 1) // m * m


# ----------------------------------------------------------------------------
# Fused kernel: one grid step handles one lane-dense tile of entities.
#   inputs : cell/pos/neg  [B_pad, D]  (constant index_map -> resident in VMEM)
#            ent           [TN,  D]    (tiled along the grid)
#   outputs: loss          (1, 1)      SMEM scalar (written once, at j == 0)
#            relevance     [B_pad, TN] VMEM tile   (lane-dense, multiple of 128)
# ----------------------------------------------------------------------------
def _fused_kernel(cell_ref, pos_ref, neg_ref, ent_ref, loss_ref, rel_ref, *,
                  batch, margin, eps):
    j = pl.program_id(0)

    x = cell_ref[...]                       # [B_pad, D], native dtype (MXU input)
    y = ent_ref[...]                        # [TN,   D]
    xf = x.astype(jnp.float32)
    yf = y.astype(jnp.float32)

    # ---- relevance tile: -sqrt(max(||x||^2 + ||y||^2 - 2 x.y, 0)) ----------
    xy = jax.lax.dot_general(
        x, y, (((1,), (1,)), ((), ())),
        preferred_element_type=jnp.float32)                          # [B_pad, TN]
    x2 = jnp.sum(xf * xf, axis=-1, keepdims=True)                    # [B_pad, 1]
    # Row-form ||y||^2 straight off the MXU: avoids an XLU [N,1]->[1,N] relayout
    # (the MXU slot is otherwise idle in that bundle).
    ones = jnp.ones((1, yf.shape[-1]), jnp.float32)
    y2_row = jax.lax.dot_general(
        ones, yf * yf, (((1,), (1,)), ((), ())),
        preferred_element_type=jnp.float32)                          # [1, TN]
    d2 = jnp.maximum(x2 + y2_row - 2.0 * xy, 0.0)
    rel_ref[...] = -jnp.sqrt(d2)

    # ---- triplet margin loss: computed once, on the first entity tile ------
    @pl.when(j == 0)
    def _():
        p = pos_ref[...].astype(jnp.float32)
        n = neg_ref[...].astype(jnp.float32)
        # F.pairwise_distance adds eps element-wise to the difference.
        dp = jnp.sqrt(jnp.sum((xf - p + eps) ** 2, axis=-1, keepdims=True))
        dn = jnp.sqrt(jnp.sum((xf - n + eps) ** 2, axis=-1, keepdims=True))
        hinge = jnp.maximum(dp - dn + margin, 0.0)                   # [B_pad, 1]
        # Mask out zero-padded batch rows before the mean.
        row = jax.lax.broadcasted_iota(jnp.int32, hinge.shape, 0)
        hinge = jnp.where(row < batch, hinge, 0.0)
        loss_ref[0, 0] = jnp.sum(hinge) / jnp.float32(batch)


# ----------------------------------------------------------------------------
# BiEncoderTriplet forward (embedding path)
# ----------------------------------------------------------------------------
def bi_encoder_triplet_forward(cell_emb, pos_ent_emb, neg_ent_emb, ent_emb):
    """Returns (loss, relevance_score) exactly like BiEncoderTriplet.forward
    when embeddings are supplied directly."""
    B, D = cell_emb.shape
    N, D2 = ent_emb.shape
    assert D == D2, "hidden dims must match"

    # Pad batch rows to the sublane quantum and the entity pool to a lane-dense
    # tile (256 on v6e/v7x-friendly sizes, 128 otherwise).  Pads are zeros and
    # are sliced away after the call; padded loss rows are masked in-kernel.
    B_pad = _round_up(B, 8)
    tn = 256 if _round_up(N, 128) >= 256 else 128
    N_pad = _round_up(N, tn)

    cell_p = jnp.pad(cell_emb, ((0, B_pad - B), (0, 0)))
    pos_p = jnp.pad(pos_ent_emb, ((0, B_pad - B), (0, 0)))
    neg_p = jnp.pad(neg_ent_emb, ((0, B_pad - B), (0, 0)))
    ent_p = jnp.pad(ent_emb, ((0, N_pad - N), (0, 0)))

    kernel = functools.partial(_fused_kernel, batch=B, margin=1.0, eps=1e-6)

    loss, rel = pl.pallas_call(
        kernel,
        grid=(N_pad // tn,),
        in_specs=[
            pl.BlockSpec((B_pad, D), lambda j: (0, 0)),   # cell: resident
            pl.BlockSpec((B_pad, D), lambda j: (0, 0)),   # pos : resident
            pl.BlockSpec((B_pad, D), lambda j: (0, 0)),   # neg : resident
            pl.BlockSpec((tn, D), lambda j: (j, 0)),      # ent : tiled
        ],
        out_specs=(
            pl.BlockSpec(memory_space=pltpu.MemorySpace.SMEM),   # scalar loss
            pl.BlockSpec((B_pad, tn), lambda j: (0, j)),         # relevance tile
        ),
        out_shape=(
            jax.ShapeDtypeStruct((1, 1), jnp.float32),
            jax.ShapeDtypeStruct((B_pad, N_pad), jnp.float32),
        ),
        # Loss output (and the resident cell/pos/neg blocks) span the whole
        # grid, so the entity-tile axis is a reduction-like axis -> "arbitrary".
        compiler_params=pltpu.CompilerParams(
            dimension_semantics=("arbitrary",)),
    )(cell_p, pos_p, neg_p, ent_p)

    relevance_score = jnp.squeeze(rel[:B, :N])
    return loss[0, 0], relevance_score


# ----------------------------------------------------------------------------
# Plain-JAX reference (mirrors the PyTorch ops)
# ----------------------------------------------------------------------------
def _reference(cell, pos, neg, ent):
    eps = 1e-6
    dp = jnp.sqrt(jnp.sum((cell - pos + eps) ** 2, axis=-1))
    dn = jnp.sqrt(jnp.sum((cell - neg + eps) ** 2, axis=-1))
    loss = jnp.mean(jnp.maximum(dp - dn + 1.0, 0.0))
    d = jnp.sqrt(jnp.sum((cell[:, None, :] - ent[None, :, :]) ** 2, axis=-1))
    return loss, jnp.squeeze(-d)


if __name__ == "__main__":
    key = jax.random.PRNGKey(0)
    k1, k2, k3, k4 = jax.random.split(key, 4)

    # Case 1: aligned shapes (hidden=128 stands in for 768 of the real model).
    B, D, N_ENT = 8, 128, 16
    cell_emb = jax.random.normal(k1, (B, D), dtype=jnp.float32)
    pos_ent_emb = jax.random.normal(k2, (B, D), dtype=jnp.float32)
    neg_ent_emb = jax.random.normal(k3, (B, D), dtype=jnp.float32)
    ent_emb = jax.random.normal(k4, (N_ENT, D), dtype=jnp.float32)

    loss, relevance = bi_encoder_triplet_forward(
        cell_emb, pos_ent_emb, neg_ent_emb, ent_emb)
    jax.block_until_ready((loss, relevance))

    ref_loss, ref_rel = _reference(cell_emb, pos_ent_emb, neg_ent_emb, ent_emb)
    assert jnp.allclose(loss, ref_loss, atol=1e-4), (loss, ref_loss)
    assert jnp.allclose(relevance, ref_rel, atol=1e-3), "relevance mismatch"

    # Case 2: ragged shapes -> exercises batch/entity padding + loss masking.
    B2, N2 = 5, 10
    loss2, rel2 = bi_encoder_triplet_forward(
        cell_emb[:B2], pos_ent_emb[:B2], neg_ent_emb[:B2], ent_emb[:N2])
    jax.block_until_ready((loss2, rel2))
    ref_loss2, ref_rel2 = _reference(
        cell_emb[:B2], pos_ent_emb[:B2], neg_ent_emb[:B2], ent_emb[:N2])
    assert jnp.allclose(loss2, ref_loss2, atol=1e-4), (loss2, ref_loss2)
    assert jnp.allclose(rel2, ref_rel2, atol=1e-3), "padded relevance mismatch"

    print("KERNEL_OK")
</pallas_src>

<mosaic_0001>
module attributes {stable_mosaic.version = 11 : i64} {
  func.func @_fused_kernel(%arg0: i32, %arg1: memref<8x128xf32, #tpu.memory_space<vmem>>, %arg2: memref<8x128xf32, #tpu.memory_space<vmem>>, %arg3: memref<8x128xf32, #tpu.memory_space<vmem>>, %arg4: memref<128x128xf32, #tpu.memory_space<vmem>>, %arg5: memref<1x1xf32, #tpu.memory_space<smem>>, %arg6: memref<8x128xf32, #tpu.memory_space<vmem>>) attributes {dimension_semantics = [#tpu.dimension_semantics<arbitrary>], iteration_bounds = array<i64: 1>, scalar_prefetch = 0 : i64, scratch_operands = 0 : i64, tpu.core_type = #tpu.core_type<tc>, window_params = [{pipeline_mode = #tpu.pipeline_mode<synchronous>, transform_indices = @transform_0, window_bounds = array<i64: 8, 128>}, {pipeline_mode = #tpu.pipeline_mode<synchronous>, transform_indices = @transform_1, window_bounds = array<i64: 8, 128>}, {pipeline_mode = #tpu.pipeline_mode<synchronous>, transform_indices = @transform_2, window_bounds = array<i64: 8, 128>}, {transform_indices = @transform_3, window_bounds = array<i64: 128, 128>}, {transform_indices = @transform_4, window_bounds = array<i64: 1, 1>}, {transform_indices = @transform_5, window_bounds = array<i64: 8, 128>}]} {
    %c0 = arith.constant 0 : index
    %c0_0 = arith.constant 0 : index
    %0 = vector.load %arg1[%c0, %c0_0] : memref<8x128xf32, #tpu.memory_space<vmem>>, vector<8x128xf32>
    %c0_1 = arith.constant 0 : index
    %c0_2 = arith.constant 0 : index
    %1 = vector.load %arg4[%c0_1, %c0_2] : memref<128x128xf32, #tpu.memory_space<vmem>>, vector<128x128xf32>
    %cst = arith.constant dense<0.000000e+00> : vector<8x128xf32>
    %2 = tpu.matmul %0, %1, %cst {dimension_numbers = #tpu.dot_dimension_numbers<[1], [1], [0], [0], [0, 0, 1, 0], [], []>} : vector<8x128xf32>, vector<128x128xf32>, vector<8x128xf32> -> vector<8x128xf32>
    %3 = arith.mulf %0, %0 : vector<8x128xf32>
    %cst_3 = arith.constant dense<0.000000e+00> : vector<8xf32>
    %4 = vector.multi_reduction <add>, %3, %cst_3 [1] : vector<8x128xf32> to vector<8xf32>
    %5 = vector.shape_cast %4 : vector<8xf32> to vector<8x1xf32>
    %cst_4 = arith.constant 1.000000e+00 : f32
    %6 = vector.broadcast %cst_4 : f32 to vector<1x128xf32>
    %7 = arith.mulf %1, %1 : vector<128x128xf32>
    %cst_5 = arith.constant dense<0.000000e+00> : vector<1x128xf32>
    %8 = tpu.matmul %6, %7, %cst_5 {dimension_numbers = #tpu.dot_dimension_numbers<[1], [1], [0], [0], [0, 0, 1, 0], [], []>} : vector<1x128xf32>, vector<128x128xf32>, vector<1x128xf32> -> vector<1x128xf32>
    %9 = vector.broadcast %5 : vector<8x1xf32> to vector<8x128xf32>
    %10 = vector.broadcast %8 : vector<1x128xf32> to vector<8x128xf32>
    %11 = arith.addf %9, %10 : vector<8x128xf32>
    %cst_6 = arith.constant 2.000000e+00 : f32
    %12 = vector.broadcast %cst_6 : f32 to vector<8x128xf32>
    %13 = arith.mulf %12, %2 : vector<8x128xf32>
    %14 = arith.subf %11, %13 : vector<8x128xf32>
    %cst_7 = arith.constant 0.000000e+00 : f32
    %15 = vector.broadcast %cst_7 : f32 to vector<8x128xf32>
    %16 = arith.maximumf %14, %15 : vector<8x128xf32>
    %17 = math.sqrt %16 : vector<8x128xf32>
    %cst_8 = arith.constant 0.000000e+00 : f32
    %18 = vector.broadcast %cst_8 : f32 to vector<8x128xf32>
    %19 = arith.subf %18, %17 : vector<8x128xf32>
    %c0_9 = arith.constant 0 : index
    %c0_10 = arith.constant 0 : index
    %20 = vector.load %arg6[%c0_9, %c0_10] : memref<8x128xf32, #tpu.memory_space<vmem>>, vector<8x128xf32>
    tpu.vector_store %arg6[%c0_9, %c0_10], %19 {strides = array<i32>} : memref<8x128xf32, #tpu.memory_space<vmem>>, vector<8x128xf32>,
    %c0_i32 = arith.constant 0 : i32
    %21 = arith.cmpi eq, %arg0, %c0_i32 : i32
    %22 = arith.extui %21 : i1 to i32
    %c0_i32_11 = arith.constant 0 : i32
    %23 = arith.cmpi ne, %22, %c0_i32_11 : i32
    scf.if %23 {
      %c0_12 = arith.constant 0 : index
      %c0_13 = arith.constant 0 : index
      %24 = vector.load %arg2[%c0_12, %c0_13] : memref<8x128xf32, #tpu.memory_space<vmem>>, vector<8x128xf32>
      %c0_14 = arith.constant 0 : index
      %c0_15 = arith.constant 0 : index
      %25 = vector.load %arg3[%c0_14, %c0_15] : memref<8x128xf32, #tpu.memory_space<vmem>>, vector<8x128xf32>
      %26 = arith.subf %0, %24 : vector<8x128xf32>
      %cst_16 = arith.constant 9.99999997E-7 : f32
      %27 = vector.broadcast %cst_16 : f32 to vector<8x128xf32>
      %28 = arith.addf %26, %27 : vector<8x128xf32>
      %29 = arith.mulf %28, %28 : vector<8x128xf32>
      %cst_17 = arith.constant dense<0.000000e+00> : vector<8xf32>
      %30 = vector.multi_reduction <add>, %29, %cst_17 [1] : vector<8x128xf32> to vector<8xf32>
      %31 = vector.shape_cast %30 : vector<8xf32> to vector<8x1xf32>
      %32 = math.sqrt %31 : vector<8x1xf32>
      %33 = arith.subf %0, %25 : vector<8x128xf32>
      %cst_18 = arith.constant 9.99999997E-7 : f32
      %34 = vector.broadcast %cst_18 : f32 to vector<8x128xf32>
      %35 = arith.addf %33, %34 : vector<8x128xf32>
      %36 = arith.mulf %35, %35 : vector<8x128xf32>
      %cst_19 = arith.constant dense<0.000000e+00> : vector<8xf32>
      %37 = vector.multi_reduction <add>, %36, %cst_19 [1] : vector<8x128xf32> to vector<8xf32>
      %38 = vector.shape_cast %37 : vector<8xf32> to vector<8x1xf32>
      %39 = math.sqrt %38 : vector<8x1xf32>
      %40 = arith.subf %32, %39 : vector<8x1xf32>
      %cst_20 = arith.constant 1.000000e+00 : f32
      %41 = vector.broadcast %cst_20 : f32 to vector<8x1xf32>
      %42 = arith.addf %40, %41 : vector<8x1xf32>
      %cst_21 = arith.constant 0.000000e+00 : f32
      %43 = vector.broadcast %cst_21 : f32 to vector<8x1xf32>
      %44 = arith.maximumf %42, %43 : vector<8x1xf32>
      %45 = tpu.iota {dimensions = array<i32: 0>} : vector<8x1xi32>
      %c8_i32 = arith.constant 8 : i32
      %46 = vector.broadcast %c8_i32 : i32 to vector<8x1xi32>
      %47 = arith.cmpi slt, %45, %46 : vector<8x1xi32>
      %cst_22 = arith.constant 0.000000e+00 : f32
      %48 = vector.broadcast %cst_22 : f32 to vector<8x1xf32>
      %49 = arith.select %47, %44, %48 : vector<8x1xi1>, vector<8x1xf32>
      %50 = vector.shape_cast %49 : vector<8x1xf32> to vector<1x8x1xf32>
      %cst_23 = arith.constant dense<0.000000e+00> : vector<1xf32>
      %51 = vector.multi_reduction <add>, %50, %cst_23 [1, 2] : vector<1x8x1xf32> to vector<1xf32>
      %52 = vector.shape_cast %51 : vector<1xf32> to vector<1x1x1xf32>
      %53 = vector.extract %52[0, 0, 0] : f32 from vector<1x1x1xf32>
      %cst_24 = arith.constant 8.000000e+00 : f32
      %54 = arith.divf %53, %cst_24 : f32
      %c0_25 = arith.constant 0 : index
      %c0_26 = arith.constant 0 : index
      %55 = memref.load %arg5[%c0_25, %c0_26] : memref<1x1xf32, #tpu.memory_space<smem>>
      memref.store %54, %arg5[%c0_25, %c0_26] : memref<1x1xf32, #tpu.memory_space<smem>>
    } else {
    }
    return
  }
  func.func @transform_0(%arg0: i32) -> (i32, i32) {
    %c0_i32 = arith.constant 0 : i32
    %c0_i32_0 = arith.constant 0 : i32
    %c0_i32_1 = arith.constant 0 : i32
    return %c0_i32, %c0_i32_0 : i32, i32
  }
  func.func @transform_1(%arg0: i32) -> (i32, i32) {
    %c0_i32 = arith.constant 0 : i32
    %c0_i32_0 = arith.constant 0 : i32
    %c0_i32_1 = arith.constant 0 : i32
    return %c0_i32, %c0_i32_0 : i32, i32
  }
  func.func @transform_2(%arg0: i32) -> (i32, i32) {
    %c0_i32 = arith.constant 0 : i32
    %c0_i32_0 = arith.constant 0 : i32
    %c0_i32_1 = arith.constant 0 : i32
    return %c0_i32, %c0_i32_0 : i32, i32
  }
  func.func @transform_3(%arg0: i32) -> (i32, i32) {
    %c0_i32 = arith.constant 0 : i32
    %c0_i32_0 = arith.constant 0 : i32
    return %arg0, %c0_i32 : i32, i32
  }
  func.func @transform_4(%arg0: i32) -> (i32, i32) {
    %c0_i32 = arith.constant 0 : i32
    %c0_i32_0 = arith.constant 0 : i32
    %c0_i32_1 = arith.constant 0 : i32
    return %c0_i32, %c0_i32_0 : i32, i32
  }
  func.func @transform_5(%arg0: i32) -> (i32, i32) {
    %c0_i32 = arith.constant 0 : i32
    %c0_i32_0 = arith.constant 0 : i32
    return %c0_i32, %arg0 : i32, i32
  }
}

</mosaic_0001>

<llo_original>
// kernel: tpu_custom_call.1
$region0: #{tpu_custom_call.1}
  #allocation0 [shape = 'u32[]', space=smem, size = 0x4, offset = 0x4, fixed_abs, tag = 'smem constant byte address 0x4 - core index']
  #allocation1 [shape = 'u32[144,128]{1,0:T(1,128)}', space=vmem, size = 0x12000, scoped, tag = 'internal scratch']
  %s0 = inlined_call_operand.hbm [shape: f32[8,128], index: 0, kind: input, shape index: {}]
  %s1 = inlined_call_operand.hbm [shape: f32[8,128], index: 1, kind: input, shape index: {}]
  %s2 = inlined_call_operand.hbm [shape: f32[8,128], index: 2, kind: input, shape index: {}]
  %s3 = inlined_call_operand.hbm [shape: f32[128,128], index: 3, kind: input, shape index: {}]
  %s4 = inlined_call_operand.hbm [shape: f32[1,1], index: 4, kind: output, shape index: {0}]
  %s5 = inlined_call_operand.hbm [shape: f32[8,128], index: 5, kind: output, shape index: {1}]
  %6 = xla_tuple %s4, %s5
  %s7 = sld [smem:[#allocation0]]
  $region54: #{tpu_custom_call.1} parent=0
    _
  %s9 = ssub.s32 1, %s7
  %s10 = scalar_select 0, %s9, %s7
  $region1: #{tpu_custom_call.1} parent=0
    #allocation2 [shape = 'u8[4096]{0}', space=vmem, size = 0x1000, scoped, tag = 'input window, operand 0, single buffered']
    #allocation3 [shape = 's32[1]{0}', space=sflag, size = 0x4, scoped, tag = 'scoped memory for tpu_custom_call.1']
    #allocation4 [shape = 's32[1]{0}', space=sflag, size = 0x4, scoped, tag = 'scoped memory for tpu_custom_call.1']
    #allocation5 [shape = 's32[1]{0}', space=sflag, size = 0x4, scoped, tag = 'scoped memory for tpu_custom_call.1']
    #allocation6 [shape = 'u8[4096]{0}', space=vmem, size = 0x1000, scoped, tag = 'input window, operand 1, single buffered']
    #allocation7 [shape = 's32[1]{0}', space=sflag, size = 0x4, scoped, tag = 'scoped memory for tpu_custom_call.1']
    #allocation8 [shape = 'u8[4096]{0}', space=vmem, size = 0x1000, scoped, tag = 'input window, operand 2, single buffered']
    #allocation9 [shape = 'u8[65536]{0}', space=vmem, size = 0x10000, scoped, tag = 'input window, operand 3, single buffered']
    #allocation10 [shape = 's32[1]{0}', space=sflag, size = 0x4, scoped, tag = 'scoped memory for tpu_custom_call.1']
    #allocation11 [shape = 'u8[512]{0}', space=smem, size = 0x200, scoped, tag = 'output window, operand 0, single buffered']
    #allocation12 [shape = 'u8[4096]{0}', space=vmem, size = 0x1000, scoped, tag = 'output window, operand 1, single buffered']
    %11 = vsyncpa [#allocation3], 0
    %12 = vsyncpa [#allocation7], 0
    %13 = vsyncpa [#allocation10], 0
    %14 = vsyncpa [#allocation5], 0
    %15 = vsyncpa [#allocation4], 0
    // Predicated region
    $region2: #{tpu_custom_call.1} parent=1 // pred_check
      _
    $region3: #{tpu_custom_call.1} parent=1 // pred_check_branch
      %17 = sbr.rel (0) target = $region5
    $region4: #{tpu_custom_call.1} parent=1 // pred_region
      %s19 = ssub.s32 128, 128
      %20 = vsyncadd [#allocation3], %s19
      %s22 = sshll.u32 [#allocation2], 4
      %s23 = int_to_ptr.vmem [resolvable:$true] %s22
      %25 = dma.hbm_to_vmem [thread:$0]  %s0, 128, %s23, [#allocation3]
    $region5: #{tpu_custom_call.1} parent=1 // pred_fallthru
      _
    // Predicated region
    $region6: #{tpu_custom_call.1} parent=1 // pred_check
      _
    $region7: #{tpu_custom_call.1} parent=1 // pred_check_branch
      %27 = sbr.rel (0) target = $region9
    $region8: #{tpu_custom_call.1} parent=1 // pred_region
      %s29 = ssub.s32 128, 128
      %30 = vsyncadd [#allocation7], %s29
      %s32 = sshll.u32 [#allocation6], 4
      %s33 = int_to_ptr.vmem [resolvable:$true] %s32
      %35 = dma.hbm_to_vmem [thread:$0]  %s1, 128, %s33, [#allocation7]
    $region9: #{tpu_custom_call.1} parent=1 // pred_fallthru
      _
    // Predicated region
    $region10: #{tpu_custom_call.1} parent=1 // pred_check
      _
    $region11: #{tpu_custom_call.1} parent=1 // pred_check_branch
      %37 = sbr.rel (0) target = $region13
    $region12: #{tpu_custom_call.1} parent=1 // pred_region
      %s39 = ssub.s32 128, 128
      %40 = vsyncadd [#allocation7], %s39
      %s42 = sshll.u32 [#allocation8], 4
      %s43 = int_to_ptr.vmem [resolvable:$true] %s42
      %45 = dma.hbm_to_vmem [thread:$0]  %s2, 128, %s43, [#allocation7]
    $region13: #{tpu_custom_call.1} parent=1 // pred_fallthru
      _
    // Predicated region
    $region14: #{tpu_custom_call.1} parent=1 // pred_check
      _
    $region15: #{tpu_custom_call.1} parent=1 // pred_check_branch
      %47 = sbr.rel (0) target = $region17
    $region16: #{tpu_custom_call.1} parent=1 // pred_region
      %s49 = ssub.s32 2048, 2048
      %50 = vsyncadd [#allocation10], %s49
      %s51 = sshll.u32 [#allocation9], 4
      %s52 = int_to_ptr.vmem [resolvable:$true] %s51
      %57 = dma.hbm_to_vmem [thread:$0]  %s3, 2048, %s52, [#allocation10], 128, 128, 8
    $region17: #{tpu_custom_call.1} parent=1 // pred_fallthru
      _
    // Predicated region
    $region18: #{tpu_custom_call.1} parent=1 // pred_check
      _
    $region19: #{tpu_custom_call.1} parent=1 // pred_check_branch
      %59 = sbr.rel (0) target = $region21
    $region20: #{tpu_custom_call.1} parent=1 // pred_region
      %60 = dma.done [#allocation3], 128
    $region21: #{tpu_custom_call.1} parent=1 // pred_fallthru
      _
    // Predicated region
    $region22: #{tpu_custom_call.1} parent=1 // pred_check
      _
    $region23: #{tpu_custom_call.1} parent=1 // pred_check_branch
      %62 = sbr.rel (0) target = $region25
    $region24: #{tpu_custom_call.1} parent=1 // pred_region
      %63 = dma.done [#allocation7], 128
    $region25: #{tpu_custom_call.1} parent=1 // pred_fallthru
      _
    // Predicated region
    $region26: #{tpu_custom_call.1} parent=1 // pred_check
      _
    $region27: #{tpu_custom_call.1} parent=1 // pred_check_branch
      %65 = sbr.rel (0) target = $region29
    $region28: #{tpu_custom_call.1} parent=1 // pred_region
      %66 = dma.done [#allocation7], 128
    $region29: #{tpu_custom_call.1} parent=1 // pred_fallthru
      _
    // Predicated region
    $region30: #{tpu_custom_call.1} parent=1 // pred_check
      _
    $region31: #{tpu_custom_call.1} parent=1 // pred_check_branch
      %68 = sbr.rel (0) target = $region33
    $region32: #{tpu_custom_call.1} parent=1 // pred_region
      %69 = dma.done [#allocation10], 2048
    $region33: #{tpu_custom_call.1} parent=1 // pred_fallthru
      _
    %v70 = vld [vmem:[#allocation2] sm:$0xff]
    %v71 = vld [vmem:[#allocation9] sm:$0xff]
    %v72 = vld [vmem:[#allocation9 + $0x8] sm:$0xff]
    %v73 = vld [vmem:[#allocation9 + $0x10] sm:$0xff]
    %v74 = vld [vmem:[#allocation9 + $0x18] sm:$0xff]
    %v75 = vld [vmem:[#allocation9 + $0x20] sm:$0xff]
    %v76 = vld [vmem:[#allocation9 + $0x28] sm:$0xff]
    %v77 = vld [vmem:[#allocation9 + $0x30] sm:$0xff]
    %v78 = vld [vmem:[#allocation9 + $0x38] sm:$0xff]
    %v79 = vld [vmem:[#allocation9 + $0x40] sm:$0xff]
    %v80 = vld [vmem:[#allocation9 + $0x48] sm:$0xff]
    %v81 = vld [vmem:[#allocation9 + $0x50] sm:$0xff]
    %v82 = vld [vmem:[#allocation9 + $0x58] sm:$0xff]
    %v83 = vld [vmem:[#allocation9 + $0x60] sm:$0xff]
    %v84 = vld [vmem:[#allocation9 + $0x68] sm:$0xff]
    %v85 = vld [vmem:[#allocation9 + $0x70] sm:$0xff]
    %v86 = vld [vmem:[#allocation9 + $0x78] sm:$0xff]
    %87 = vmatprep.subr.mxu0 0.0
    %88 = vmatpush1.xpose.msra.mxu0 %v86
    %89 = vmatprep.subr.mxu0 0.0
    %90 = vmatpush1.xpose.msra.mxu0 %v85
    %91 = vmatprep.subr.mxu0 0.0
    %92 = vmatpush1.xpose.msra.mxu0 %v84
    %93 = vmatprep.subr.mxu0 0.0
    %94 = vmatpush1.xpose.msra.mxu0 %v83
    %95 = vmatprep.subr.mxu0 0.0
    %96 = vmatpush1.xpose.msra.mxu0 %v82
    %97 = vmatprep.subr.mxu0 0.0
    %98 = vmatpush1.xpose.msra.mxu0 %v81
    %99 = vmatprep.subr.mxu0 0.0
    %100 = vmatpush1.xpose.msra.mxu0 %v80
    %101 = vmatprep.subr.mxu0 0.0
    %102 = vmatpush1.xpose.msra.mxu0 %v79
    %103 = vmatprep.subr.mxu0 0.0
    %104 = vmatpush1.xpose.msra.mxu0 %v78
    %105 = vmatprep.subr.mxu0 0.0
    %106 = vmatpush1.xpose.msra.mxu0 %v77
    %107 = vmatprep.subr.mxu0 0.0
    %108 = vmatpush1.xpose.msra.mxu0 %v76
    %109 = vmatprep.subr.mxu0 0.0
    %110 = vmatpush1.xpose.msra.mxu0 %v75
    %111 = vmatprep.subr.mxu0 0.0
    %112 = vmatpush1.xpose.msra.mxu0 %v74
    %113 = vmatprep.subr.mxu0 0.0
    %114 = vmatpush1.xpose.msra.mxu0 %v73
    %115 = vmatprep.subr.mxu0 0.0
    %116 = vmatpush1.xpose.msra.mxu0 %v72
    %117 = vmatprep.subr.mxu0 0.0
    %118 = vmatpush1.xpose.msra.mxu0 %v71
    %119 = vmatprep.subr.mxu0 0.0
    %120 = vmatpush2.xpose.msra.mxu0 0.0
    %121 = vmatprep.subr.mxu0 0.0
    %122 = vmatpush2.xpose.msra.mxu0 0.0
    %123 = vmatprep.subr.mxu0 0.0
    %124 = vmatpush2.xpose.msra.mxu0 0.0
    %125 = vmatprep.subr.mxu0 0.0
    %126 = vmatpush2.xpose.msra.mxu0 0.0
    %127 = vmatprep.subr.mxu0 0.0
    %128 = vmatpush2.xpose.msra.mxu0 0.0
    %129 = vmatprep.subr.mxu0 0.0
    %130 = vmatpush2.xpose.msra.mxu0 0.0
    %131 = vmatprep.subr.mxu0 0.0
    %132 = vmatpush2.xpose.msra.mxu0 0.0
    %133 = vmatprep.subr.mxu0 0.0
    %134 = vmatpush2.xpose.msra.mxu0 0.0
    %135 = vmatprep.subr.mxu0 0.0
    %136 = vmatpush2.xpose.msra.mxu0 0.0
    %137 = vmatprep.subr.mxu0 0.0
    %138 = vmatpush2.xpose.msra.mxu0 0.0
    %139 = vmatprep.subr.mxu0 0.0
    %140 = vmatpush2.xpose.msra.mxu0 0.0
    %141 = vmatprep.subr.mxu0 0.0
    %142 = vmatpush2.xpose.msra.mxu0 0.0
    %143 = vmatprep.subr.mxu0 0.0
    %144 = vmatpush2.xpose.msra.mxu0 0.0
    %145 = vmatprep.subr.mxu0 0.0
    %146 = vmatpush2.xpose.msra.mxu0 0.0
    %147 = vmatprep.subr.mxu0 0.0
    %148 = vmatpush2.xpose.msra.mxu0 0.0
    %149 = vmatprep.subr.mxu0 0.0
    %150 = vmatpush2.xpose.msra.mxu0 0.0
    %151 = vmatprep.mubr.f32.mxu0 0.0
    %152 = vmatmul.mubr.f32.gmra.mxu0 %v70
    %v153 = vpop.f32.mrf.mxu0
    %v154 = vadd.f32 0.0, %v153
    %v155 = vpop.f32.mrf.mxu0
    %156 = vdwg.mxu0
    %v157 = vmul.f32 %v70, %v70
    %158 = vadd.xlane.f32.xlu0 %v157
    %v159 = vpop.xlane.xlu0 %158
    %v160 = vmul.f32 %v71, %v71
    %v161 = vmul.f32 %v72, %v72
    %v162 = vmul.f32 %v73, %v73
    %v163 = vmul.f32 %v74, %v74
    %v164 = vmul.f32 %v75, %v75
    %v165 = vmul.f32 %v76, %v76
    %v166 = vmul.f32 %v77, %v77
    %v167 = vmul.f32 %v78, %v78
    %v168 = vmul.f32 %v79, %v79
    %v169 = vmul.f32 %v80, %v80
    %v170 = vmul.f32 %v81, %v81
    %v171 = vmul.f32 %v82, %v82
    %v172 = vmul.f32 %v83, %v83
    %v173 = vmul.f32 %v84, %v84
    %v174 = vmul.f32 %v85, %v85
    %v175 = vmul.f32 %v86, %v86
    %176 = vmatprep.subr.mxu0 0.0
    %177 = vmatpush1.xpose.msra.mxu0 %v175
    %178 = vmatprep.subr.mxu0 0.0
    %179 = vmatpush1.xpose.msra.mxu0 %v174
    %180 = vmatprep.subr.mxu0 0.0
    %181 = vmatpush1.xpose.msra.mxu0 %v173
    %182 = vmatprep.subr.mxu0 0.0
    %183 = vmatpush1.xpose.msra.mxu0 %v172
    %184 = vmatprep.subr.mxu0 0.0
    %185 = vmatpush1.xpose.msra.mxu0 %v171
    %186 = vmatprep.subr.mxu0 0.0
    %187 = vmatpush1.xpose.msra.mxu0 %v170
    %188 = vmatprep.subr.mxu0 0.0
    %189 = vmatpush1.xpose.msra.mxu0 %v169
    %190 = vmatprep.subr.mxu0 0.0
    %191 = vmatpush1.xpose.msra.mxu0 %v168
    %192 = vmatprep.subr.mxu0 0.0
    %193 = vmatpush1.xpose.msra.mxu0 %v167
    %194 = vmatprep.subr.mxu0 0.0
    %195 = vmatpush1.xpose.msra.mxu0 %v166
    %196 = vmatprep.subr.mxu0 0.0
    %197 = vmatpush1.xpose.msra.mxu0 %v165
    %198 = vmatprep.subr.mxu0 0.0
    %199 = vmatpush1.xpose.msra.mxu0 %v164
    %200 = vmatprep.subr.mxu0 0.0
    %201 = vmatpush1.xpose.msra.mxu0 %v163
    %202 = vmatprep.subr.mxu0 0.0
    %203 = vmatpush1.xpose.msra.mxu0 %v162
    %204 = vmatprep.subr.mxu0 0.0
    %205 = vmatpush1.xpose.msra.mxu0 %v161
    %206 = vmatprep.subr.mxu0 0.0
    %207 = vmatpush1.xpose.msra.mxu0 %v160
    %208 = vmatprep.subr.mxu0 0.0
    %209 = vmatpush2.xpose.msra.mxu0 0.0
    %210 = vmatprep.subr.mxu0 0.0
    %211 = vmatpush2.xpose.msra.mxu0 0.0
    %212 = vmatprep.subr.mxu0 0.0
    %213 = vmatpush2.xpose.msra.mxu0 0.0
    %214 = vmatprep.subr.mxu0 0.0
    %215 = vmatpush2.xpose.msra.mxu0 0.0
    %216 = vmatprep.subr.mxu0 0.0
    %217 = vmatpush2.xpose.msra.mxu0 0.0
    %218 = vmatprep.subr.mxu0 0.0
    %219 = vmatpush2.xpose.msra.mxu0 0.0
    %220 = vmatprep.subr.mxu0 0.0
    %221 = vmatpush2.xpose.msra.mxu0 0.0
    %222 = vmatprep.subr.mxu0 0.0
    %223 = vmatpush2.xpose.msra.mxu0 0.0
    %224 = vmatprep.subr.mxu0 0.0
    %225 = vmatpush2.xpose.msra.mxu0 0.0
    %226 = vmatprep.subr.mxu0 0.0
    %227 = vmatpush2.xpose.msra.mxu0 0.0
    %228 = vmatprep.subr.mxu0 0.0
    %229 = vmatpush2.xpose.msra.mxu0 0.0
    %230 = vmatprep.subr.mxu0 0.0
    %231 = vmatpush2.xpose.msra.mxu0 0.0
    %232 = vmatprep.subr.mxu0 0.0
    %233 = vmatpush2.xpose.msra.mxu0 0.0
    %234 = vmatprep.subr.mxu0 0.0
    %235 = vmatpush2.xpose.msra.mxu0 0.0
    %236 = vmatprep.subr.mxu0 0.0
    %237 = vmatpush2.xpose.msra.mxu0 0.0
    %238 = vmatprep.subr.mxu0 0.0
    %239 = vmatpush2.xpose.msra.mxu0 0.0
    %240 = vmatprep.mubr.f32.mxu0 0.0
    %241 = vmatmul.mubr.f32.gmra.mxu0 1.0
    %v242 = vpop.f32.mrf.mxu0
    %v243 = vadd.f32 0.0, %v242
    %v244 = vpop.f32.mrf.mxu0
    %245 = vdwg.mxu0
    %v246 = vlaneseq
    %v247 = vshrl.u32 %v246, 7
    %v248 = vsub.s32 0, %v247
    %v249 = vrot.slane %v243, %v248
    %v250 = vadd.f32 %v159, %v249
    %v251 = vmul.f32 %v154, 2.0
    %v252 = vsub.f32 %v250, %v251
    %v253 = vmax.f32 %v252, 0.0
    %v254 = vrsqrt.pop %v253
    %v255 = vmul.f32 %v253, %v254
    %vm256 = vcmp.eq.f32.partialorder %v253, inf
    %v257 = vsel %vm256, %v253, %v255
    %vm258 = vcmp.eq.f32.partialorder %v253, 0.0
    %v259 = vand.u32 %v253, 2147483648
    %v260 = vsel %vm258, %v259, %v257
    %v261 = vsub.f32 0.0, %v260
    %262 = vst [vmem:[#allocation12] sm:$0xff] %v261
    %p263 = scmp.eq.s32.totalorder 0, 0
    // Predicated region
    $region34: #{tpu_custom_call.1} parent=1 // pred_check
      %p264 = pneg %p263
    $region35: #{tpu_custom_call.1} parent=1 // pred_check_branch
      %266 = sbr.rel (%p264) target = $region37
    $region36: #{tpu_custom_call.1} parent=1 // pred_region
      %v267 = vld [vmem:[#allocation6] sm:$0xff]
      %v268 = vld [vmem:[#allocation8] sm:$0xff]
      %v269 = vsub.f32 %v70, %v267
      %v270 = vadd.f32 %v269, 1e-06
      %v271 = vmul.f32 %v270, %v270
      %272 = vadd.xlane.f32.xlu0 %v271
      %v273 = vpop.xlane.xlu0 %272
      %v274 = vrsqrt.pop %v273
      %v275 = vmul.f32 %v273, %v274
      %vm276 = vcmp.eq.f32.partialorder %v273, inf
      %v277 = vsel %vm276, %v273, %v275
      %vm278 = vcmp.eq.f32.partialorder %v273, 0.0
      %v279 = vand.u32 %v273, 2147483648
      %v280 = vsel %vm278, %v279, %v277
      %v281 = vsub.f32 %v70, %v268
      %v282 = vadd.f32 %v281, 1e-06
      %v283 = vmul.f32 %v282, %v282
      %284 = vadd.xlane.f32.xlu0 %v283
      %v285 = vpop.xlane.xlu0 %284
      %v286 = vrsqrt.pop %v285
      %v287 = vmul.f32 %v285, %v286
      %vm288 = vcmp.eq.f32.partialorder %v285, inf
      %v289 = vsel %vm288, %v285, %v287
      %vm290 = vcmp.eq.f32.partialorder %v285, 0.0
      %v291 = vand.u32 %v285, 2147483648
      %v292 = vsel %vm290, %v291, %v289
      %v293 = vsub.f32 %v280, %v292
      %v294 = vadd.f32 %v293, 1.0
      %v295 = vmax.f32 %v294, 0.0
      %v296 = vlaneseq
      %v297 = vshrl.u32 %v296, 7
      %vm298 = vcmp.lt.s32.totalorder %v297, 8
      %v299 = vsel %vm298, %v295, 0.0
      %vm300 = vcmask 7168
      %v301 = vsel %vm300, %v299, 0.0
      %302 = vadd.xlane.f32.xlu0 %v301
      %v303 = vpop.xlane.xlu0 %302
      %v304 = vrot.slane %v303, 4
      %v305 = vadd.f32 %v303, %v304
      %v306 = vrot.slane %v305, 2
      %v307 = vadd.f32 %v305, %v306
      %v308 = vrot.slane %v307, 1
      %v309 = vadd.f32 %v307, %v308
      %s310 = vtos %v309
      %v311 = vrcp.pop 8.0
      %s312 = vtos %v311
      %s313 = smul.f32 %s310, %s312
      %s314 = scalar_lea.smem [#allocation11], 0
      %315 = sst [smem:[%s314]] %s313
    $region37: #{tpu_custom_call.1} parent=1 // pred_fallthru
      _
    // Predicated region
    $region38: #{tpu_custom_call.1} parent=1 // pred_check
      _
    $region39: #{tpu_custom_call.1} parent=1 // pred_check_branch
      %317 = sbr.rel (0) target = $region41
    $region40: #{tpu_custom_call.1} parent=1 // pred_region
      %s319 = ssub.s32 16, 16
      %320 = vsyncadd [#allocation5], %s319
      %323 = dma.smem_to_hbm [#allocation11], 16, %s4, [#allocation5]
    $region41: #{tpu_custom_call.1} parent=1 // pred_fallthru
      _
    // Predicated region
    $region42: #{tpu_custom_call.1} parent=1 // pred_check
      _
    $region43: #{tpu_custom_call.1} parent=1 // pred_check_branch
      %325 = sbr.rel (0) target = $region45
    $region44: #{tpu_custom_call.1} parent=1 // pred_region
      %s327 = ssub.s32 128, 128
      %328 = vsyncadd [#allocation4], %s327
      %s330 = sshll.u32 [#allocation12], 4
      %s331 = int_to_ptr.vmem [resolvable:$true] %s330
      %333 = dma.vmem_to_hbm [thread:$0]  %s331, 128, %s5, [#allocation4]
    $region45: #{tpu_custom_call.1} parent=1 // pred_fallthru
      _
    // Predicated region
    $region46: #{tpu_custom_call.1} parent=1 // pred_check
      _
    $region47: #{tpu_custom_call.1} parent=1 // pred_check_branch
      %335 = sbr.rel (0) target = $region49
    $region48: #{tpu_custom_call.1} parent=1 // pred_region
      %336 = dma.done [#allocation5], 16
    $region49: #{tpu_custom_call.1} parent=1 // pred_fallthru
      _
    // Predicated region
    $region50: #{tpu_custom_call.1} parent=1 // pred_check
      _
    $region51: #{tpu_custom_call.1} parent=1 // pred_check_branch
      %338 = sbr.rel (0) target = $region53
    $region52: #{tpu_custom_call.1} parent=1 // pred_region
      %339 = dma.done [#allocation4], 128
    $region53: #{tpu_custom_call.1} parent=1 // pred_fallthru
      _
    %340 = sfence
    %341 = vsyncpa [#allocation3], 1
    %342 = vsyncpa [#allocation7], 1
    %343 = vsyncpa [#allocation10], 1
    %344 = vsyncpa [#allocation4], 1
    %345 = vsyncpa [#allocation5], 1

</llo_original>
